<compile_context>
chip_gen: v5e
topology: v5e:2x2
jax: 0.10.0
libtpu: 0.0.40
codegen_flags: <defaults>
</compile_context>

<pallas_src>
import functools

import jax
import jax.numpy as jnp
from jax import lax
from jax.experimental import pallas as pl
from jax.experimental.pallas import tpu as pltpu

# Contract the last dim of both operands: x(B,K) . W(N,K) -> (B,N)  (i.e. x @ W.T)
_NT_DIMS = (((1,), (1,)), ((), ()))


def _mlp_kernel(x_ref, w1_ref, w2_ref, o_ref):
    # x_ref : (B_pad, input_dim)    resident across the whole grid
    # w1_ref: (hidden, input_dim)   nn.Linear (out, in) layout, resident
    # w2_ref: (TN, hidden)          one output tile of fc2, (out, in) layout
    # o_ref : (B_pad, TN)
    h = lax.dot_general(x_ref[...], w1_ref[...], _NT_DIMS,
                        preferred_element_type=jnp.float32)
    h = jnp.maximum(h, 0.0)  # ReLU on the VPU
    y = lax.dot_general(h.astype(w2_ref.dtype), w2_ref[...], _NT_DIMS,
                        preferred_element_type=jnp.float32)
    o_ref[...] = y.astype(o_ref.dtype)


def _pick_tile(n, preferred=512):
    """Largest lane-dense (multiple of 128) tile <= preferred that divides n."""
    for t in (preferred, 256, 128):
        if n >= t and n % t == 0:
            return t
    # Ragged tail: Pallas pads/clips the last block (still correct, just masked).
    return n if n <= preferred else preferred


@functools.partial(jax.jit, static_argnames=("output_ch", "resolution"))
def mlp_forward(x, x_ts, w1, w2, *, output_ch, resolution):
    """Pallas-fused equivalent of MLP.forward.

    x  : (B, input_dim)            -- cast to weight dtype, like PyTorch
    x_ts: unused (the PyTorch forward ignores it)
    w1 : (hidden_dim, input_dim)   -- nn.Linear (out, in) layout, NOT transposed here
    w2 : (output_dim, hidden_dim)  -- nn.Linear (out, in) layout, NOT transposed here
    returns (B, output_ch, resolution, resolution) in the weight dtype.
    """
    del x_ts  # not used in the reference forward
    dtype = w1.dtype
    x = x.astype(dtype)

    B, input_dim = x.shape
    hidden_dim, in1 = w1.shape
    output_dim, hid2 = w2.shape
    assert in1 == input_dim and hid2 == hidden_dim
    assert output_dim == output_ch * resolution * resolution

    # Pad batch to a multiple of 8 sublanes: unmasked vector stores, fuller MXU rows.
    b_pad = max(8, -(-B // 8) * 8)
    if b_pad != B:
        x = jnp.pad(x, ((0, b_pad - B), (0, 0)))

    tn = _pick_tile(output_dim, 512)
    grid = (pl.cdiv(output_dim, tn),)

    itemsize = jnp.dtype(dtype).itemsize
    cost = pl.CostEstimate(
        flops=2 * b_pad * (input_dim * hidden_dim + hidden_dim * output_dim),
        transcendentals=0,
        bytes_accessed=(w1.size + w2.size + x.size + b_pad * output_dim) * itemsize,
    )

    out = pl.pallas_call(
        _mlp_kernel,
        out_shape=jax.ShapeDtypeStruct((b_pad, output_dim), dtype),
        grid=grid,
        in_specs=[
            pl.BlockSpec((b_pad, input_dim), lambda j: (0, 0)),       # x: resident
            pl.BlockSpec((hidden_dim, input_dim), lambda j: (0, 0)),  # fc1 W: resident
            pl.BlockSpec((tn, hidden_dim), lambda j: (j, 0)),         # fc2 W: streamed tiles
        ],
        out_specs=pl.BlockSpec((b_pad, tn), lambda j: (0, j)),
        compiler_params=pltpu.CompilerParams(
            # Tiles are self-contained (h recomputed per tile), so the axis is
            # safe to shard across TensorCores on v7x.
            dimension_semantics=("parallel",),
            vmem_limit_bytes=32 * 1024 * 1024,
        ),
        cost_estimate=cost,
    )(x, w1, w2)

    out = out[:B]
    # Equivalent of x.view(B, output_ch, resolution, resolution)  (NCHW)
    return out.reshape(B, output_ch, resolution, resolution)


if __name__ == "__main__":
    # Module defaults: input_dim=256, hidden_dim=512, output_ch=1280, resolution=1
    B = 2
    input_dim, hidden_dim = 256, 512
    output_ch, resolution = 1280, 1
    output_dim = output_ch * resolution * resolution

    key = jax.random.PRNGKey(0)
    kx, kts, kw1, kw2 = jax.random.split(key, 4)

    x = jax.random.normal(kx, (B, input_dim), dtype=jnp.float32)
    x_ts = jax.random.normal(kts, (B,), dtype=jnp.float32)  # unused, as in PyTorch forward

    # Deterministic parameter init (nn.Linear layout: (out_features, in_features)),
    # then cast ONCE to bf16 outside the hot path (halves weight HBM traffic).
    w1_f32 = (jax.random.uniform(kw1, (hidden_dim, input_dim), dtype=jnp.float32) - 0.5) \
             * (2.0 / jnp.sqrt(input_dim))
    w2_f32 = (jax.random.uniform(kw2, (output_dim, hidden_dim), dtype=jnp.float32) - 0.5) \
             * (2.0 / jnp.sqrt(hidden_dim))
    w1 = w1_f32.astype(jnp.bfloat16)
    w2 = w2_f32.astype(jnp.bfloat16)

    y = mlp_forward(x, x_ts, w1, w2, output_ch=output_ch, resolution=resolution)
    y = jax.block_until_ready(y)

    # Reference with the same bf16 weights and f32 accumulation.
    xb = x.astype(jnp.bfloat16)
    h_ref = jnp.maximum(
        lax.dot_general(xb, w1, _NT_DIMS, preferred_element_type=jnp.float32), 0.0)
    ref = lax.dot_general(h_ref.astype(jnp.bfloat16), w2, _NT_DIMS,
                          preferred_element_type=jnp.float32).astype(jnp.bfloat16)
    ref = ref.reshape(B, output_ch, resolution, resolution)

    assert y.shape == (B, output_ch, resolution, resolution)
    assert y.dtype == w1.dtype
    assert jnp.allclose(y.astype(jnp.float32), ref.astype(jnp.float32),
                        atol=2e-2, rtol=2e-2)

    print("KERNEL_OK")
</pallas_src>

<mosaic_0001>
module attributes {stable_mosaic.version = 11 : i64} {
  func.func @_mlp_kernel(%arg0: i32, %arg1: memref<8x256xbf16, #tpu.memory_space<vmem>>, %arg2: memref<512x256xbf16, #tpu.memory_space<vmem>>, %arg3: memref<256x512xbf16, #tpu.memory_space<vmem>>, %arg4: memref<8x256xbf16, #tpu.memory_space<vmem>>) attributes {dimension_semantics = [#tpu.dimension_semantics<parallel>], iteration_bounds = array<i64: 5>, scalar_prefetch = 0 : i64, scratch_operands = 0 : i64, tpu.core_type = #tpu.core_type<tc>, window_params = [{pipeline_mode = #tpu.pipeline_mode<synchronous>, transform_indices = @transform_0, window_bounds = array<i64: 8, 256>}, {pipeline_mode = #tpu.pipeline_mode<synchronous>, transform_indices = @transform_1, window_bounds = array<i64: 512, 256>}, {transform_indices = @transform_2, window_bounds = array<i64: 256, 512>}, {transform_indices = @transform_3, window_bounds = array<i64: 8, 256>}]} {
    %c0 = arith.constant 0 : index
    %c0_0 = arith.constant 0 : index
    %0 = vector.load %arg1[%c0, %c0_0] : memref<8x256xbf16, #tpu.memory_space<vmem>>, vector<8x256xbf16>
    %c0_1 = arith.constant 0 : index
    %c0_2 = arith.constant 0 : index
    %1 = vector.load %arg2[%c0_1, %c0_2] : memref<512x256xbf16, #tpu.memory_space<vmem>>, vector<512x256xbf16>
    %cst = arith.constant dense<0.000000e+00> : vector<8x512xf32>
    %2 = tpu.matmul %0, %1, %cst {dimension_numbers = #tpu.dot_dimension_numbers<[1], [1], [0], [0], [0, 0, 1, 0], [], []>} : vector<8x256xbf16>, vector<512x256xbf16>, vector<8x512xf32> -> vector<8x512xf32>
    %cst_3 = arith.constant 0.000000e+00 : f32
    %3 = vector.broadcast %cst_3 : f32 to vector<8x512xf32>
    %4 = arith.maximumf %2, %3 : vector<8x512xf32>
    %5 = arith.truncf %4 : vector<8x512xf32> to vector<8x512xbf16>
    %c0_4 = arith.constant 0 : index
    %c0_5 = arith.constant 0 : index
    %6 = vector.load %arg3[%c0_4, %c0_5] : memref<256x512xbf16, #tpu.memory_space<vmem>>, vector<256x512xbf16>
    %cst_6 = arith.constant dense<0.000000e+00> : vector<8x256xf32>
    %7 = tpu.matmul %5, %6, %cst_6 {dimension_numbers = #tpu.dot_dimension_numbers<[1], [1], [0], [0], [0, 0, 1, 0], [], []>} : vector<8x512xbf16>, vector<256x512xbf16>, vector<8x256xf32> -> vector<8x256xf32>
    %8 = arith.truncf %7 : vector<8x256xf32> to vector<8x256xbf16>
    %c0_7 = arith.constant 0 : index
    %c0_8 = arith.constant 0 : index
    %9 = vector.load %arg4[%c0_7, %c0_8] : memref<8x256xbf16, #tpu.memory_space<vmem>>, vector<8x256xbf16>
    tpu.vector_store %arg4[%c0_7, %c0_8], %8 {strides = array<i32>} : memref<8x256xbf16, #tpu.memory_space<vmem>>, vector<8x256xbf16>,
    return
  }
  func.func @transform_0(%arg0: i32) -> (i32, i32) {
    %c0_i32 = arith.constant 0 : i32
    %c0_i32_0 = arith.constant 0 : i32
    %c0_i32_1 = arith.constant 0 : i32
    return %c0_i32, %c0_i32_0 : i32, i32
  }
  func.func @transform_1(%arg0: i32) -> (i32, i32) {
    %c0_i32 = arith.constant 0 : i32
    %c0_i32_0 = arith.constant 0 : i32
    %c0_i32_1 = arith.constant 0 : i32
    return %c0_i32, %c0_i32_0 : i32, i32
  }
  func.func @transform_2(%arg0: i32) -> (i32, i32) {
    %c0_i32 = arith.constant 0 : i32
    %c0_i32_0 = arith.constant 0 : i32
    return %arg0, %c0_i32 : i32, i32
  }
  func.func @transform_3(%arg0: i32) -> (i32, i32) {
    %c0_i32 = arith.constant 0 : i32
    %c0_i32_0 = arith.constant 0 : i32
    return %c0_i32, %arg0 : i32, i32
  }
}

</mosaic_0001>

<llo_original>
// kernel: mlp_forward.1
$region0: #{mlp_forward.1}
  #allocation0 [shape = 'u32[]', space=smem, size = 0x4, offset = 0x4, fixed_abs, tag = 'smem constant byte address 0x4 - core index']
  #allocation1 [shape = 'u32[72,128]{1,0:T(1,128)}', space=vmem, size = 0x9000, scoped, tag = 'internal scratch']
  %s0 = inlined_call_operand.vmem [shape: bf16[8,256], index: 0, kind: input, shape index: {}]
  %s1 = inlined_call_operand.hbm [shape: bf16[512,256], index: 1, kind: input, shape index: {}]
  %s2 = inlined_call_operand.hbm [shape: bf16[1280,512], index: 2, kind: input, shape index: {}]
  %s3 = inlined_call_operand.vmem [shape: bf16[8,1280], index: 3, kind: output, shape index: {}]
  %s4 = sld [smem:[#allocation0]]
  $region53: #{mlp_forward.1} parent=0
    _
  %s6 = ssub.s32 1, %s4
  %s7 = scalar_select 0, %s6, %s4
  $region1: #{mlp_forward.1} parent=0
    #allocation2 [shape = 'u8[262144]{0}', space=vmem, size = 0x40000, scoped, tag = 'input window, operand 1, single buffered']
    #allocation3 [shape = 's32[2]{0}', space=sflag, size = 0x8, scoped, tag = 'scoped memory for mlp_forward.1']
    #allocation4 [shape = 'u8[524288]{0}', space=vmem, size = 0x80000, scoped, tag = 'input window, operand 2']
    #allocation5 [shape = 's32[2]{0}', space=sflag, size = 0x8, scoped, tag = 'scoped memory for mlp_forward.1']
    %8 = vsyncpa [#allocation3], 0
    %9 = vsyncpa [#allocation5], 0
    %s10 = scalar_lea.sflag [#allocation5], 1
    %11 = vsyncpa %s10, 0
    loop: start=0, step=1, limit=7
    $region2: #{mlp_forward.1} parent=1 // loop_pre_header
      _
    $region3: #{mlp_forward.1} parent=1 // loop_header
      %s13 = sphi 0, %s17
      %p14 = scmp.ge.s32.totalorder %s13, 7
      %s21 = sphi 0, %s21
      %s23 = sphi 0, %s21
      %s24 = sphi 0, %s23
      %s38 = sphi 0, %s24
      %s42 = sphi 0, %s42
      %s44 = sphi 0, %s42
      %s45 = sphi 0, %s44
      %s59 = sphi 0, %s45
      %s65 = sphi 0, %s67
      %s68 = sphi 0, %s65
      %s69 = sphi 0, %s68
      %s85 = sphi 0, %s69
      %s91 = sphi 0, %s93
      %s94 = sphi 0, %s91
      %s95 = sphi 0, %s94
      %s111 = sphi 0, %s95
    $region4: #{mlp_forward.1} parent=1 // loop_header_branch
      %16 = sbr.rel (%p14) target = $region8
    $region5: #{mlp_forward.1} parent=1 // loop_body
      %s18 = ssub.s32 %s13, 1
      %s19 = ssub.s32 %s13, 2
      %s20 = sadd.s32 %s13, 1
      %s22 = sadd.s32 %s21, 1
      %p25 = scmp.eq.s32.totalorder %s13, 4
      %p26 = scmp.ne.s32.totalorder %s21, %s23
      %p27 = scmp.eq.s32.totalorder %s13, 0
      %p28 = por %p26, %p27
      %p29 = scmp.ne.s32.totalorder %s21, %s23
      %p30 = scmp.eq.s32.totalorder %s18, 4
      %p31 = por %p29, %p30
      %p32 = scmp.ne.s32.totalorder %s23, %s24
      %p33 = scmp.eq.s32.totalorder %s18, 0
      %p34 = por %p32, %p33
      %p35 = scmp.ne.s32.totalorder %s23, %s24
      %p36 = scmp.eq.s32.totalorder %s19, 4
      %p37 = por %p35, %p36
      %p39 = scmp.ne.s32.totalorder %s24, %s38
      %p40 = scmp.eq.s32.totalorder %s19, 0
      %p41 = por %p39, %p40
      %s43 = sadd.s32 %s42, 1
      %p46 = scmp.eq.s32.totalorder %s13, 4
      %p47 = scmp.ne.s32.totalorder %s42, %s44
      %p48 = scmp.eq.s32.totalorder %s13, 0
      %p49 = por %p47, %p48
      %p50 = scmp.ne.s32.totalorder %s42, %s44
      %p51 = scmp.eq.s32.totalorder %s18, 4
      %p52 = por %p50, %p51
      %p53 = scmp.ne.s32.totalorder %s44, %s45
      %p54 = scmp.eq.s32.totalorder %s18, 0
      %p55 = por %p53, %p54
      %p56 = scmp.ne.s32.totalorder %s44, %s45
      %p57 = scmp.eq.s32.totalorder %s19, 4
      %p58 = por %p56, %p57
      %p60 = scmp.ne.s32.totalorder %s45, %s59
      %p61 = scmp.eq.s32.totalorder %s19, 0
      %p62 = por %p60, %p61
      %s63 = ssub.s32 %s13, %s20
      %p64 = scmp.eq.s32.totalorder %s63, 0
      %s66 = sadd.s32 %s65, 1
      %s67 = scalar_select %p64, %s65, %s66
      %p70 = pneg %p64
      %p71 = scmp.eq.s32.totalorder %s13, 4
      %p72 = por %p70, %p71
      %p73 = scmp.ne.s32.totalorder %s65, %s68
      %p74 = scmp.eq.s32.totalorder %s13, 0
      %p75 = por %p73, %p74
      %p76 = scmp.ne.s32.totalorder %s65, %s68
      %p77 = scmp.eq.s32.totalorder %s18, 4
      %p78 = por %p76, %p77
      %p79 = scmp.ne.s32.totalorder %s68, %s69
      %p80 = scmp.eq.s32.totalorder %s18, 0
      %p81 = por %p79, %p80
      %p82 = scmp.ne.s32.totalorder %s68, %s69
      %p83 = scmp.eq.s32.totalorder %s19, 4
      %p84 = por %p82, %p83
      %p86 = scmp.ne.s32.totalorder %s69, %s85
      %p87 = scmp.eq.s32.totalorder %s19, 0
      %p88 = por %p86, %p87
      %s89 = ssub.s32 %s13, %s20
      %p90 = scmp.eq.s32.totalorder %s89, 0
      %s92 = sadd.s32 %s91, 1
      %s93 = scalar_select %p90, %s91, %s92
      %p96 = pneg %p90
      %p97 = scmp.eq.s32.totalorder %s13, 4
      %p98 = por %p96, %p97
      %p99 = scmp.ne.s32.totalorder %s91, %s94
      %p100 = scmp.eq.s32.totalorder %s13, 0
      %p101 = por %p99, %p100
      %p102 = scmp.ne.s32.totalorder %s91, %s94
      %p103 = scmp.eq.s32.totalorder %s18, 4
      %p104 = por %p102, %p103
      %p105 = scmp.ne.s32.totalorder %s94, %s95
      %p106 = scmp.eq.s32.totalorder %s18, 0
      %p107 = por %p105, %p106
      %p108 = scmp.ne.s32.totalorder %s94, %s95
      %p109 = scmp.eq.s32.totalorder %s19, 4
      %p110 = por %p108, %p109
      %p112 = scmp.ne.s32.totalorder %s95, %s111
      %p113 = scmp.eq.s32.totalorder %s19, 0
      %p114 = por %p112, %p113
      %p115 = scmp.le.s32.totalorder 1, %s13
      %p116 = scmp.lt.s32.totalorder %s13, 6
      %p117 = pnand %p115, %p116
      %p118 = pneg %p117
      // Predicated region
      $region9: #{mlp_forward.1} parent=5 // pred_check
        _
      $region10: #{mlp_forward.1} parent=5 // pred_check_branch
        %120 = sbr.rel (%p117) target = $region12
      $region11: #{mlp_forward.1} parent=5 // pred_region
        %s121 = ssub.s32 %s13, 1
        // Predicated region
        $region13: #{mlp_forward.1} parent=11 // pred_check
          %p122 = pneg %p34
        $region14: #{mlp_forward.1} parent=11 // pred_check_branch
          %124 = sbr.rel (%p122) target = $region16
        $region15: #{mlp_forward.1} parent=11 // pred_region
          _
        $region16: #{mlp_forward.1} parent=11 // pred_fallthru
          _
        // Predicated region
        $region17: #{mlp_forward.1} parent=11 // pred_check
          %p125 = pneg %p55
        $region18: #{mlp_forward.1} parent=11 // pred_check_branch
          %127 = sbr.rel (%p125) target = $region20
        $region19: #{mlp_forward.1} parent=11 // pred_region
          %129 = vsyncadd [#allocation3], 0
          %s130 = sshll.u32 %s1, 4
          %s131 = int_to_ptr.hbm [resolvable:$true] %s130
          %s132 = sshll.u32 [#allocation2], 4
          %s133 = int_to_ptr.vmem [resolvable:$true] %s132
          %138 = dma.hbm_to_vmem [thread:$0]  %s131, 8192, %s133, [#allocation3], 128, 128, 8
        $region20: #{mlp_forward.1} parent=11 // pred_fallthru
          _
      $region12: #{mlp_forward.1} parent=5 // pred_fallthru
        _
      %p139 = scmp.lt.s32.totalorder %s13, 5
      // Predicated region
      $region21: #{mlp_forward.1} parent=5 // pred_check
        %p140 = pneg %p139
      $region22: #{mlp_forward.1} parent=5 // pred_check_branch
        %142 = sbr.rel (%p140) target = $region24
      $region23: #{mlp_forward.1} parent=5 // pred_region
        // Predicated region
        $region25: #{mlp_forward.1} parent=23 // pred_check
          %p143 = pneg %p75
        $region26: #{mlp_forward.1} parent=23 // pred_check_branch
          %145 = sbr.rel (%p143) target = $region28
        $region27: #{mlp_forward.1} parent=23 // pred_region
          %s146 = sand.u32 %s65, 1
          %s147 = scalar_lea.sflag [#allocation5], %s146
          %s148 = sand.u32 %s65, 1
          %s149 = smul.addr %s148, 512
          %s150 = scalar_lea.vmem [#allocation4], %s149
          %s151 = smul.u32 32, %s13
          %153 = vsyncadd %s147, 0
          %s154 = smul.addr %s151, 4
          %s155 = smul.addr %s154, 4
          %s156 = scalar_lea.hbm %s2, %s155
          %s157 = sshll.u32 %s156, 4
          %s158 = int_to_ptr.hbm [resolvable:$true] %s157
          %s159 = sshll.u32 %s150, 4
          %s160 = int_to_ptr.vmem [resolvable:$true] %s159
          %165 = dma.hbm_to_vmem [thread:$0]  %s158, 8192, %s160, %s147, 256, 256, 16
        $region28: #{mlp_forward.1} parent=23 // pred_fallthru
          _
      $region24: #{mlp_forward.1} parent=5 // pred_fallthru
        _
      %p166 = scmp.le.s32.totalorder 1, %s13
      %p167 = scmp.lt.s32.totalorder %s13, 6
      %p168 = pnand %p166, %p167
      %p169 = pneg %p168
      // Predicated region
      $region29: #{mlp_forward.1} parent=5 // pred_check
        _
      $region30: #{mlp_forward.1} parent=5 // pred_check_branch
        %171 = sbr.rel (%p168) target = $region32
      $region31: #{mlp_forward.1} parent=5 // pred_region
        %s172 = ssub.s32 %s13, 1
        // Predicated region
        $region33: #{mlp_forward.1} parent=31 // pred_check
          %p173 = pneg %p55
        $region34: #{mlp_forward.1} parent=31 // pred_check_branch
          %175 = sbr.rel (%p173) target = $region36
        $region35: #{mlp_forward.1} parent=31 // pred_region
          %177 = dma.done [#allocation3], 8192
        $region36: #{mlp_forward.1} parent=31 // pred_fallthru
          _
        %s178 = sand.u32 %s68, 1
        %s179 = scalar_lea.sflag [#allocation5], %s178
        %s180 = sand.u32 %s68, 1
        %s181 = smul.addr %s180, 512
        %s182 = scalar_lea.vmem [#allocation4], %s181
        // Predicated region
        $region37: #{mlp_forward.1} parent=31 // pred_check
          %p183 = pneg %p81
        $region38: #{mlp_forward.1} parent=31 // pred_check_branch
          %185 = sbr.rel (%p183) target = $region40
        $region39: #{mlp_forward.1} parent=31 // pred_region
          %187 = dma.done %s179, 8192
        $region40: #{mlp_forward.1} parent=31 // pred_fallthru
          _
        %p188 = pneg %p34
        %p189 = pneg %p31
        %p190 = pneg %p55
        %p191 = pneg %p52
        %s192 = sand.u32 %s68, 1
        %s193 = scalar_lea.sflag [#allocation5], %s192
        %s194 = sand.u32 %s68, 1
        %s195 = smul.addr %s194, 512
        %s196 = scalar_lea.vmem [#allocation4], %s195
        %p197 = pneg %p81
        %p198 = pneg %p78
        %p199 = pneg %p107
        %p200 = pneg %p104
        %s201 = smul.u32 2, %s18
        %p202 = scmp.lt.s32.totalorder %s201, 9
        %s203 = scalar_select %p202, %s201, 9
        %s204 = smul.addr %s203, 4
        %s205 = scalar_lea.vmem %s3, %s204
        %s206 = smul.u32 32, %s18
        %s207 = smul.u32 2, %s18
        %p208 = scmp.lt.s32.totalorder %s207, 9
        %s209 = scalar_select %p208, %s207, 9
        %s210 = smul.addr %s209, 4
        %s211 = scalar_lea.vmem %s3, %s210
        %s212 = smul.u32 2, %s18
        %v213 = vld [vmem:[%s0] sm:$0xff]
        %v214 = vld [vmem:[#allocation2] sm:$0xff]
        %v215 = vld [vmem:[#allocation2 + $0x8] sm:$0xff]
        %v216 = vld [vmem:[#allocation2 + $0x10] sm:$0xff]
        %v217 = vld [vmem:[#allocation2 + $0x18] sm:$0xff]
        %v218 = vld [vmem:[#allocation2 + $0x20] sm:$0xff]
        %v219 = vld [vmem:[#allocation2 + $0x28] sm:$0xff]
        %v220 = vld [vmem:[#allocation2 + $0x30] sm:$0xff]
        %v221 = vld [vmem:[#allocation2 + $0x38] sm:$0xff]
        %v222 = vld [vmem:[#allocation2 + $0x40] sm:$0xff]
        %v223 = vld [vmem:[#allocation2 + $0x48] sm:$0xff]
        %v224 = vld [vmem:[#allocation2 + $0x50] sm:$0xff]
        %v225 = vld [vmem:[#allocation2 + $0x58] sm:$0xff]
        %v226 = vld [vmem:[#allocation2 + $0x60] sm:$0xff]
        %v227 = vld [vmem:[#allocation2 + $0x68] sm:$0xff]
        %v228 = vld [vmem:[#allocation2 + $0x70] sm:$0xff]
        %v229 = vld [vmem:[#allocation2 + $0x78] sm:$0xff]
        %v230 = vld [vmem:[#allocation2 + $0x80] sm:$0xff]
        %v231 = vld [vmem:[#allocation2 + $0x88] sm:$0xff]
        %v232 = vld [vmem:[#allocation2 + $0x90] sm:$0xff]
        %v233 = vld [vmem:[#allocation2 + $0x98] sm:$0xff]
        %v234 = vld [vmem:[#allocation2 + $0xa0] sm:$0xff]
        %v235 = vld [vmem:[#allocation2 + $0xa8] sm:$0xff]
        %v236 = vld [vmem:[#allocation2 + $0xb0] sm:$0xff]
        %v237 = vld [vmem:[#allocation2 + $0xb8] sm:$0xff]
        %v238 = vld [vmem:[#allocation2 + $0xc0] sm:$0xff]
        %v239 = vld [vmem:[#allocation2 + $0xc8] sm:$0xff]
        %v240 = vld [vmem:[#allocation2 + $0xd0] sm:$0xff]
        %v241 = vld [vmem:[#allocation2 + $0xd8] sm:$0xff]
        %v242 = vld [vmem:[#allocation2 + $0xe0] sm:$0xff]
        %v243 = vld [vmem:[#allocation2 + $0xe8] sm:$0xff]
        %v244 = vld [vmem:[#allocation2 + $0xf0] sm:$0xff]
        %v245 = vld [vmem:[#allocation2 + $0xf8] sm:$0xff]
        %v246 = vld [vmem:[#allocation2 + $0x100] sm:$0xff]
        %v247 = vld [vmem:[#allocation2 + $0x108] sm:$0xff]
        %v248 = vld [vmem:[#allocation2 + $0x110] sm:$0xff]
        %v249 = vld [vmem:[#allocation2 + $0x118] sm:$0xff]
        %v250 = vld [vmem:[#allocation2 + $0x120] sm:$0xff]
        %v251 = vld [vmem:[#allocation2 + $0x128] sm:$0xff]
        %v252 = vld [vmem:[#allocation2 + $0x130] sm:$0xff]
        %v253 = vld [vmem:[#allocation2 + $0x138] sm:$0xff]
        %v254 = vld [vmem:[#allocation2 + $0x140] sm:$0xff]
        %v255 = vld [vmem:[#allocation2 + $0x148] sm:$0xff]
        %v256 = vld [vmem:[#allocation2 + $0x150] sm:$0xff]
        %v257 = vld [vmem:[#allocation2 + $0x158] sm:$0xff]
        %v258 = vld [vmem:[#allocation2 + $0x160] sm:$0xff]
        %v259 = vld [vmem:[#allocation2 + $0x168] sm:$0xff]
        %v260 = vld [vmem:[#allocation2 + $0x170] sm:$0xff]
        %v261 = vld [vmem:[#allocation2 + $0x178] sm:$0xff]
        %v262 = vld [vmem:[#allocation2 + $0x180] sm:$0xff]
        %v263 = vld [vmem:[#allocation2 + $0x188] sm:$0xff]
        %v264 = vld [vmem:[#allocation2 + $0x190] sm:$0xff]
        %v265 = vld [vmem:[#allocation2 + $0x198] sm:$0xff]
        %v266 = vld [vmem:[#allocation2 + $0x1a0] sm:$0xff]
        %v267 = vld [vmem:[#allocation2 + $0x1a8] sm:$0xff]
        %v268 = vld [vmem:[#allocation2 + $0x1b0] sm:$0xff]
        %v269 = vld [vmem:[#allocation2 + $0x1b8] sm:$0xff]
        %v270 = vld [vmem:[#allocation2 + $0x1c0] sm:$0xff]
        %v271 = vld [vmem:[#allocation2 + $0x1c8] sm:$0xff]
        %v272 = vld [vmem:[#allocation2 + $0x1d0] sm:$0xff]
        %v273 = vld [vmem:[#allocation2 + $0x1d8] sm:$0xff]
        %v274 = vld [vmem:[#allocation2 + $0x1e0] sm:$0xff]
        %v275 = vld [vmem:[#allocation2 + $0x1e8] sm:$0xff]
        %v276 = vld [vmem:[#allocation2 + $0x1f0] sm:$0xff]
        %v277 = vld [vmem:[#allocation2 + $0x1f8] sm:$0xff]
        %v279 = vunpack.c.l.b16 %v213
        %v280 = vunpack.c.h.b16 %v213
        %v281 = vpack.c.b16 %v279, %v279
        %v282 = vpack.c.b16 %v280, %v280
        %v349 = vunpack.c.l.b16 %v214
        %v350 = vunpack.c.h.b16 %v214
        %v351 = vunpack.c.l.b16 %v215
        %v352 = vunpack.c.h.b16 %v215
        %v353 = vunpack.c.l.b16 %v216
        %v354 = vunpack.c.h.b16 %v216
        %v355 = vunpack.c.l.b16 %v217
        %v356 = vunpack.c.h.b16 %v217
        %v357 = vunpack.c.l.b16 %v218
        %v358 = vunpack.c.h.b16 %v218
        %v359 = vunpack.c.l.b16 %v219
        %v360 = vunpack.c.h.b16 %v219
        %v361 = vunpack.c.l.b16 %v220
        %v362 = vunpack.c.h.b16 %v220
        %v363 = vunpack.c.l.b16 %v221
        %v364 = vunpack.c.h.b16 %v221
        %v365 = vunpack.c.l.b16 %v222
        %v366 = vunpack.c.h.b16 %v222
        %v367 = vunpack.c.l.b16 %v223
        %v368 = vunpack.c.h.b16 %v223
        %v369 = vunpack.c.l.b16 %v224
        %v370 = vunpack.c.h.b16 %v224
        %v371 = vunpack.c.l.b16 %v225
        %v372 = vunpack.c.h.b16 %v225
        %v373 = vunpack.c.l.b16 %v226
        %v374 = vunpack.c.h.b16 %v226
        %v375 = vunpack.c.l.b16 %v227
        %v376 = vunpack.c.h.b16 %v227
        %v377 = vunpack.c.l.b16 %v228
        %v378 = vunpack.c.h.b16 %v228
        %v379 = vunpack.c.l.b16 %v229
        %v380 = vunpack.c.h.b16 %v229
        %v381 = vunpack.c.l.b16 %v230
        %v382 = vunpack.c.h.b16 %v230
        %v383 = vunpack.c.l.b16 %v231
        %v384 = vunpack.c.h.b16 %v231
        %v385 = vunpack.c.l.b16 %v232
        %v386 = vunpack.c.h.b16 %v232
        %v387 = vunpack.c.l.b16 %v233
        %v388 = vunpack.c.h.b16 %v233
        %v389 = vunpack.c.l.b16 %v234
        %v390 = vunpack.c.h.b16 %v234
        %v391 = vunpack.c.l.b16 %v235
        %v392 = vunpack.c.h.b16 %v235
        %v393 = vunpack.c.l.b16 %v236
        %v394 = vunpack.c.h.b16 %v236
        %v395 = vunpack.c.l.b16 %v237
        %v396 = vunpack.c.h.b16 %v237
        %v397 = vunpack.c.l.b16 %v238
        %v398 = vunpack.c.h.b16 %v238
        %v399 = vunpack.c.l.b16 %v239
        %v400 = vunpack.c.h.b16 %v239
        %v401 = vunpack.c.l.b16 %v240
        %v402 = vunpack.c.h.b16 %v240
        %v403 = vunpack.c.l.b16 %v241
        %v404 = vunpack.c.h.b16 %v241
        %v405 = vunpack.c.l.b16 %v242
        %v406 = vunpack.c.h.b16 %v242
        %v407 = vunpack.c.l.b16 %v243
        %v408 = vunpack.c.h.b16 %v243
        %v409 = vunpack.c.l.b16 %v244
        %v410 = vunpack.c.h.b16 %v244
        %v411 = vunpack.c.l.b16 %v245
        %v412 = vunpack.c.h.b16 %v245
        %v413 = vunpack.c.l.b16 %v246
        %v414 = vunpack.c.h.b16 %v246
        %v415 = vunpack.c.l.b16 %v247
        %v416 = vunpack.c.h.b16 %v247
        %v417 = vunpack.c.l.b16 %v248
        %v418 = vunpack.c.h.b16 %v248
        %v419 = vunpack.c.l.b16 %v249
        %v420 = vunpack.c.h.b16 %v249
        %v421 = vunpack.c.l.b16 %v250
        %v422 = vunpack.c.h.b16 %v250
        %v423 = vunpack.c.l.b16 %v251
        %v424 = vunpack.c.h.b16 %v251
        %v425 = vunpack.c.l.b16 %v252
        %v426 = vunpack.c.h.b16 %v252
        %v427 = vunpack.c.l.b16 %v253
        %v428 = vunpack.c.h.b16 %v253
        %v429 = vunpack.c.l.b16 %v254
        %v430 = vunpack.c.h.b16 %v254
        %v431 = vunpack.c.l.b16 %v255
        %v432 = vunpack.c.h.b16 %v255
        %v433 = vunpack.c.l.b16 %v256
        %v434 = vunpack.c.h.b16 %v256
        %v435 = vunpack.c.l.b16 %v257
        %v436 = vunpack.c.h.b16 %v257
        %v437 = vunpack.c.l.b16 %v258
        %v438 = vunpack.c.h.b16 %v258
        %v439 = vunpack.c.l.b16 %v259
        %v440 = vunpack.c.h.b16 %v259
        %v441 = vunpack.c.l.b16 %v260
        %v442 = vunpack.c.h.b16 %v260
        %v443 = vunpack.c.l.b16 %v261
        %v444 = vunpack.c.h.b16 %v261
        %v445 = vunpack.c.l.b16 %v262
        %v446 = vunpack.c.h.b16 %v262
        %v447 = vunpack.c.l.b16 %v263
        %v448 = vunpack.c.h.b16 %v263
        %v449 = vunpack.c.l.b16 %v264
        %v450 = vunpack.c.h.b16 %v264
        %v451 = vunpack.c.l.b16 %v265
        %v452 = vunpack.c.h.b16 %v265
        %v453 = vunpack.c.l.b16 %v266
        %v454 = vunpack.c.h.b16 %v266
        %v455 = vunpack.c.l.b16 %v267
        %v456 = vunpack.c.h.b16 %v267
        %v457 = vunpack.c.l.b16 %v268
        %v458 = vunpack.c.h.b16 %v268
        %v459 = vunpack.c.l.b16 %v269
        %v460 = vunpack.c.h.b16 %v269
        %v461 = vunpack.c.l.b16 %v270
        %v462 = vunpack.c.h.b16 %v270
        %v463 = vunpack.c.l.b16 %v271
        %v464 = vunpack.c.h.b16 %v271
        %v465 = vunpack.c.l.b16 %v272
        %v466 = vunpack.c.h.b16 %v272
        %v467 = vunpack.c.l.b16 %v273
        %v468 = vunpack.c.h.b16 %v273
        %v469 = vunpack.c.l.b16 %v274
        %v470 = vunpack.c.h.b16 %v274
        %v471 = vunpack.c.l.b16 %v275
        %v472 = vunpack.c.h.b16 %v275
        %v473 = vunpack.c.l.b16 %v276
        %v474 = vunpack.c.h.b16 %v276
        %v475 = vunpack.c.l.b16 %v277
        %v476 = vunpack.c.h.b16 %v277
        %v477 = vpack.c.b16 %v351, %v349
        %v478 = vpack.c.b16 %v352, %v350
        %v479 = vpack.c.b16 %v355, %v353
        %v480 = vpack.c.b16 %v356, %v354
        %v481 = vpack.c.b16 %v359, %v357
        %v482 = vpack.c.b16 %v360, %v358
        %v483 = vpack.c.b16 %v363, %v361
        %v484 = vpack.c.b16 %v364, %v362
        %v485 = vpack.c.b16 %v367, %v365
        %v486 = vpack.c.b16 %v368, %v366
        %v487 = vpack.c.b16 %v371, %v369
        %v488 = vpack.c.b16 %v372, %v370
        %v489 = vpack.c.b16 %v375, %v373
        %v490 = vpack.c.b16 %v376, %v374
        %v491 = vpack.c.b16 %v379, %v377
        %v492 = vpack.c.b16 %v380, %v378
        %v493 = vpack.c.b16 %v383, %v381
        %v494 = vpack.c.b16 %v384, %v382
        %v495 = vpack.c.b16 %v387, %v385
        %v496 = vpack.c.b16 %v388, %v386
        %v497 = vpack.c.b16 %v391, %v389
        %v498 = vpack.c.b16 %v392, %v390
        %v499 = vpack.c.b16 %v395, %v393
        %v500 = vpack.c.b16 %v396, %v394
        %v501 = vpack.c.b16 %v399, %v397
        %v502 = vpack.c.b16 %v400, %v398
        %v503 = vpack.c.b16 %v403, %v401
        %v504 = vpack.c.b16 %v404, %v402
        %v505 = vpack.c.b16 %v407, %v405
        %v506 = vpack.c.b16 %v408, %v406
        %v507 = vpack.c.b16 %v411, %v409
        %v508 = vpack.c.b16 %v412, %v410
        %v509 = vpack.c.b16 %v415, %v413
        %v510 = vpack.c.b16 %v416, %v414
        %v511 = vpack.c.b16 %v419, %v417
        %v512 = vpack.c.b16 %v420, %v418
        %v513 = vpack.c.b16 %v423, %v421
        %v514 = vpack.c.b16 %v424, %v422
        %v515 = vpack.c.b16 %v427, %v425
        %v516 = vpack.c.b16 %v428, %v426
        %v517 = vpack.c.b16 %v431, %v429
        %v518 = vpack.c.b16 %v432, %v430
        %v519 = vpack.c.b16 %v435, %v433
        %v520 = vpack.c.b16 %v436, %v434
        %v521 = vpack.c.b16 %v439, %v437
        %v522 = vpack.c.b16 %v440, %v438
        %v523 = vpack.c.b16 %v443, %v441
        %v524 = vpack.c.b16 %v444, %v442
        %v525 = vpack.c.b16 %v447, %v445
        %v526 = vpack.c.b16 %v448, %v446
        %v527 = vpack.c.b16 %v451, %v449
        %v528 = vpack.c.b16 %v452, %v450
        %v529 = vpack.c.b16 %v455, %v453
        %v530 = vpack.c.b16 %v456, %v454
        %v531 = vpack.c.b16 %v459, %v457
        %v532 = vpack.c.b16 %v460, %v458
        %v533 = vpack.c.b16 %v463, %v461
        %v534 = vpack.c.b16 %v464, %v462
        %v535 = vpack.c.b16 %v467, %v465
        %v536 = vpack.c.b16 %v468, %v466
        %v537 = vpack.c.b16 %v471, %v469
        %v538 = vpack.c.b16 %v472, %v470
        %v539 = vpack.c.b16 %v475, %v473
        %v540 = vpack.c.b16 %v476, %v474
        %605 = vmatpush.bf16.xpose.msra.mxu0 %v491
        %606 = vmatpush.bf16.xpose.msra.mxu0 %v489
        %607 = vmatpush.bf16.xpose.msra.mxu0 %v487
        %608 = vmatpush.bf16.xpose.msra.mxu0 %v485
        %609 = vmatpush.bf16.xpose.msra.mxu0 %v483
        %610 = vmatpush.bf16.xpose.msra.mxu0 %v481
        %611 = vmatpush.bf16.xpose.msra.mxu0 %v479
        %612 = vmatpush.bf16.xpose.msra.mxu0 %v477
        %613 = vmatmul.bf16.gmra.mxu0 %v281
        %v614 = vpop.f32.mrf.mxu0
        %v615 = vadd.f32 0.0, %v614
        %v616 = vpop.f32.mrf.mxu0
        %617 = vdwg.mxu0
        %618 = vmatpush.bf16.xpose.msra.mxu0 %v492
        %619 = vmatpush.bf16.xpose.msra.mxu0 %v490
        %620 = vmatpush.bf16.xpose.msra.mxu0 %v488
        %621 = vmatpush.bf16.xpose.msra.mxu0 %v486
        %622 = vmatpush.bf16.xpose.msra.mxu0 %v484
        %623 = vmatpush.bf16.xpose.msra.mxu0 %v482
        %624 = vmatpush.bf16.xpose.msra.mxu0 %v480
        %625 = vmatpush.bf16.xpose.msra.mxu0 %v478
        %626 = vmatmul.bf16.gmra.mxu0 %v282
        %v627 = vpop.f32.mrf.mxu0
        %v628 = vadd.f32 %v615, %v627
        %v629 = vpop.f32.mrf.mxu0
        %630 = vdwg.mxu0
        %631 = vmatpush.bf16.xpose.msra.mxu0 %v507
        %632 = vmatpush.bf16.xpose.msra.mxu0 %v505
        %633 = vmatpush.bf16.xpose.msra.mxu0 %v503
        %634 = vmatpush.bf16.xpose.msra.mxu0 %v501
        %635 = vmatpush.bf16.xpose.msra.mxu0 %v499
        %636 = vmatpush.bf16.xpose.msra.mxu0 %v497
        %637 = vmatpush.bf16.xpose.msra.mxu0 %v495
        %638 = vmatpush.bf16.xpose.msra.mxu0 %v493
        %639 = vmatmul.bf16.gmra.mxu0 %v281
        %v640 = vpop.f32.mrf.mxu0
        %v641 = vadd.f32 0.0, %v640
        %v642 = vpop.f32.mrf.mxu0
        %643 = vdwg.mxu0
        %644 = vmatpush.bf16.xpose.msra.mxu0 %v508
        %645 = vmatpush.bf16.xpose.msra.mxu0 %v506
        %646 = vmatpush.bf16.xpose.msra.mxu0 %v504
        %647 = vmatpush.bf16.xpose.msra.mxu0 %v502
        %648 = vmatpush.bf16.xpose.msra.mxu0 %v500
        %649 = vmatpush.bf16.xpose.msra.mxu0 %v498
        %650 = vmatpush.bf16.xpose.msra.mxu0 %v496
        %651 = vmatpush.bf16.xpose.msra.mxu0 %v494
        %652 = vmatmul.bf16.gmra.mxu0 %v282
        %v653 = vpop.f32.mrf.mxu0
        %v654 = vadd.f32 %v641, %v653
        %v655 = vpop.f32.mrf.mxu0
        %656 = vdwg.mxu0
        %657 = vmatpush.bf16.xpose.msra.mxu0 %v523
        %658 = vmatpush.bf16.xpose.msra.mxu0 %v521
        %659 = vmatpush.bf16.xpose.msra.mxu0 %v519
        %660 = vmatpush.bf16.xpose.msra.mxu0 %v517
        %661 = vmatpush.bf16.xpose.msra.mxu0 %v515
        %662 = vmatpush.bf16.xpose.msra.mxu0 %v513
        %663 = vmatpush.bf16.xpose.msra.mxu0 %v511
        %664 = vmatpush.bf16.xpose.msra.mxu0 %v509
        %665 = vmatmul.bf16.gmra.mxu0 %v281
        %v666 = vpop.f32.mrf.mxu0
        %v667 = vadd.f32 0.0, %v666
        %v668 = vpop.f32.mrf.mxu0
        %669 = vdwg.mxu0
        %670 = vmatpush.bf16.xpose.msra.mxu0 %v524
        %671 = vmatpush.bf16.xpose.msra.mxu0 %v522
        %672 = vmatpush.bf16.xpose.msra.mxu0 %v520
        %673 = vmatpush.bf16.xpose.msra.mxu0 %v518
        %674 = vmatpush.bf16.xpose.msra.mxu0 %v516
        %675 = vmatpush.bf16.xpose.msra.mxu0 %v514
        %676 = vmatpush.bf16.xpose.msra.mxu0 %v512
        %677 = vmatpush.bf16.xpose.msra.mxu0 %v510
        %678 = vmatmul.bf16.gmra.mxu0 %v282
        %v679 = vpop.f32.mrf.mxu0
        %v680 = vadd.f32 %v667, %v679
        %v681 = vpop.f32.mrf.mxu0
        %682 = vdwg.mxu0
        %683 = vmatpush.bf16.xpose.msra.mxu0 %v539
        %684 = vmatpush.bf16.xpose.msra.mxu0 %v537
        %685 = vmatpush.bf16.xpose.msra.mxu0 %v535
        %686 = vmatpush.bf16.xpose.msra.mxu0 %v533
        %687 = vmatpush.bf16.xpose.msra.mxu0 %v531
        %688 = vmatpush.bf16.xpose.msra.mxu0 %v529
        %689 = vmatpush.bf16.xpose.msra.mxu0 %v527
        %690 = vmatpush.bf16.xpose.msra.mxu0 %v525
        %691 = vmatmul.bf16.gmra.mxu0 %v281
        %v692 = vpop.f32.mrf.mxu0
        %v693 = vadd.f32 0.0, %v692
        %v694 = vpop.f32.mrf.mxu0
        %695 = vdwg.mxu0
        %696 = vmatpush.bf16.xpose.msra.mxu0 %v540
        %697 = vmatpush.bf16.xpose.msra.mxu0 %v538
        %698 = vmatpush.bf16.xpose.msra.mxu0 %v536
        %699 = vmatpush.bf16.xpose.msra.mxu0 %v534
        %700 = vmatpush.bf16.xpose.msra.mxu0 %v532
        %701 = vmatpush.bf16.xpose.msra.mxu0 %v530
        %702 = vmatpush.bf16.xpose.msra.mxu0 %v528
        %703 = vmatpush.bf16.xpose.msra.mxu0 %v526
        %704 = vmatmul.bf16.gmra.mxu0 %v282
        %v705 = vpop.f32.mrf.mxu0
        %v706 = vadd.f32 %v693, %v705
        %v707 = vpop.f32.mrf.mxu0
        %708 = vdwg.mxu0
        %v709 = vmax.f32 %v628, 0.0
        %v710 = vmax.f32 %v654, 0.0
        %v711 = vmax.f32 %v680, 0.0
        %v712 = vmax.f32 %v706, 0.0
        %v713 = vpack.c.bf16 %v709, %v709
        %v714 = vpack.c.bf16 %v710, %v710
        %v715 = vpack.c.bf16 %v711, %v711
        %v716 = vpack.c.bf16 %v712, %v712
        %v717 = vld [vmem:[%s182] sm:$0xff]
        %v718 = vld [vmem:[%s182 + $0x8] sm:$0xff]
        %v719 = vld [vmem:[%s182 + $0x10] sm:$0xff]
        %v720 = vld [vmem:[%s182 + $0x18] sm:$0xff]
        %v721 = vld [vmem:[%s182 + $0x20] sm:$0xff]
        %v722 = vld [vmem:[%s182 + $0x28] sm:$0xff]
        %v723 = vld [vmem:[%s182 + $0x30] sm:$0xff]
        %v724 = vld [vmem:[%s182 + $0x38] sm:$0xff]
        %v725 = vld [vmem:[%s182 + $0x40] sm:$0xff]
        %v726 = vld [vmem:[%s182 + $0x48] sm:$0xff]
        %v727 = vld [vmem:[%s182 + $0x50] sm:$0xff]
        %v728 = vld [vmem:[%s182 + $0x58] sm:$0xff]
        %v729 = vld [vmem:[%s182 + $0x60] sm:$0xff]
        %v730 = vld [vmem:[%s182 + $0x68] sm:$0xff]
        %v731 = vld [vmem:[%s182 + $0x70] sm:$0xff]
        %v732 = vld [vmem:[%s182 + $0x78] sm:$0xff]
        %v733 = vld [vmem:[%s182 + $0x80] sm:$0xff]
        %v734 = vld [vmem:[%s182 + $0x88] sm:$0xff]
        %v735 = vld [vmem:[%s182 + $0x90] sm:$0xff]
        %v736 = vld [vmem:[%s182 + $0x98] sm:$0xff]
        %v737 = vld [vmem:[%s182 + $0xa0] sm:$0xff]
        %v738 = vld [vmem:[%s182 + $0xa8] sm:$0xff]
        %v739 = vld [vmem:[%s182 + $0xb0] sm:$0xff]
        %v740 = vld [vmem:[%s182 + $0xb8] sm:$0xff]
        %v741 = vld [vmem:[%s182 + $0xc0] sm:$0xff]
        %v742 = vld [vmem:[%s182 + $0xc8] sm:$0xff]
        %v743 = vld [vmem:[%s182 + $0xd0] sm:$0xff]
        %v744 = vld [vmem:[%s182 + $0xd8] sm:$0xff]
        %v745 = vld [vmem:[%s182 + $0xe0] sm:$0xff]
        %v746 = vld [vmem:[%s182 + $0xe8] sm:$0xff]
        %v747 = vld [vmem:[%s182 + $0xf0] sm:$0xff]
        %v748 = vld [vmem:[%s182 + $0xf8] sm:$0xff]
        %v749 = vld [vmem:[%s182 + $0x100] sm:$0xff]
        %v750 = vld [vmem:[%s182 + $0x108] sm:$0xff]
        %v751 = vld [vmem:[%s182 + $0x110] sm:$0xff]
        %v752 = vld [vmem:[%s182 + $0x118] sm:$0xff]
        %v753 = vld [vmem:[%s182 + $0x120] sm:$0xff]
        %v754 = vld [vmem:[%s182 + $0x128] sm:$0xff]
        %v755 = vld [vmem:[%s182 + $0x130] sm:$0xff]
        %v756 = vld [vmem:[%s182 + $0x138] sm:$0xff]
        %v757 = vld [vmem:[%s182 + $0x140] sm:$0xff]
        %v758 = vld [vmem:[%s182 + $0x148] sm:$0xff]
        %v759 = vld [vmem:[%s182 + $0x150] sm:$0xff]
        %v760 = vld [vmem:[%s182 + $0x158] sm:$0xff]
        %v761 = vld [vmem:[%s182 + $0x160] sm:$0xff]
        %v762 = vld [vmem:[%s182 + $0x168] sm:$0xff]
        %v763 = vld [vmem:[%s182 + $0x170] sm:$0xff]
        %v764 = vld [vmem:[%s182 + $0x178] sm:$0xff]
        %v765 = vld [vmem:[%s182 + $0x180] sm:$0xff]
        %v766 = vld [vmem:[%s182 + $0x188] sm:$0xff]
        %v767 = vld [vmem:[%s182 + $0x190] sm:$0xff]
        %v768 = vld [vmem:[%s182 + $0x198] sm:$0xff]
        %v769 = vld [vmem:[%s182 + $0x1a0] sm:$0xff]
        %v770 = vld [vmem:[%s182 + $0x1a8] sm:$0xff]
        %v771 = vld [vmem:[%s182 + $0x1b0] sm:$0xff]
        %v772 = vld [vmem:[%s182 + $0x1b8] sm:$0xff]
        %v773 = vld [vmem:[%s182 + $0x1c0] sm:$0xff]
        %v774 = vld [vmem:[%s182 + $0x1c8] sm:$0xff]
        %v775 = vld [vmem:[%s182 + $0x1d0] sm:$0xff]
        %v776 = vld [vmem:[%s182 + $0x1d8] sm:$0xff]
        %v777 = vld [vmem:[%s182 + $0x1e0] sm:$0xff]
        %v778 = vld [vmem:[%s182 + $0x1e8] sm:$0xff]
        %v779 = vld [vmem:[%s182 + $0x1f0] sm:$0xff]
        %v780 = vld [vmem:[%s182 + $0x1f8] sm:$0xff]
        %v845 = vunpack.c.l.b16 %v717
        %v846 = vunpack.c.h.b16 %v717
        %v847 = vunpack.c.l.b16 %v718
        %v848 = vunpack.c.h.b16 %v718
        %v849 = vunpack.c.l.b16 %v719
        %v850 = vunpack.c.h.b16 %v719
        %v851 = vunpack.c.l.b16 %v720
        %v852 = vunpack.c.h.b16 %v720
        %v853 = vunpack.c.l.b16 %v721
        %v854 = vunpack.c.h.b16 %v721
        %v855 = vunpack.c.l.b16 %v722
        %v856 = vunpack.c.h.b16 %v722
        %v857 = vunpack.c.l.b16 %v723
        %v858 = vunpack.c.h.b16 %v723
        %v859 = vunpack.c.l.b16 %v724
        %v860 = vunpack.c.h.b16 %v724
        %v861 = vunpack.c.l.b16 %v725
        %v862 = vunpack.c.h.b16 %v725
        %v863 = vunpack.c.l.b16 %v726
        %v864 = vunpack.c.h.b16 %v726
        %v865 = vunpack.c.l.b16 %v727
        %v866 = vunpack.c.h.b16 %v727
        %v867 = vunpack.c.l.b16 %v728
        %v868 = vunpack.c.h.b16 %v728
        %v869 = vunpack.c.l.b16 %v729
        %v870 = vunpack.c.h.b16 %v729
        %v871 = vunpack.c.l.b16 %v730
        %v872 = vunpack.c.h.b16 %v730
        %v873 = vunpack.c.l.b16 %v731
        %v874 = vunpack.c.h.b16 %v731
        %v875 = vunpack.c.l.b16 %v732
        %v876 = vunpack.c.h.b16 %v732
        %v877 = vunpack.c.l.b16 %v733
        %v878 = vunpack.c.h.b16 %v733
        %v879 = vunpack.c.l.b16 %v734
        %v880 = vunpack.c.h.b16 %v734
        %v881 = vunpack.c.l.b16 %v735
        %v882 = vunpack.c.h.b16 %v735
        %v883 = vunpack.c.l.b16 %v736
        %v884 = vunpack.c.h.b16 %v736
        %v885 = vunpack.c.l.b16 %v737
        %v886 = vunpack.c.h.b16 %v737
        %v887 = vunpack.c.l.b16 %v738
        %v888 = vunpack.c.h.b16 %v738
        %v889 = vunpack.c.l.b16 %v739
        %v890 = vunpack.c.h.b16 %v739
        %v891 = vunpack.c.l.b16 %v740
        %v892 = vunpack.c.h.b16 %v740
        %v893 = vunpack.c.l.b16 %v741
        %v894 = vunpack.c.h.b16 %v741
        %v895 = vunpack.c.l.b16 %v742
        %v896 = vunpack.c.h.b16 %v742
        %v897 = vunpack.c.l.b16 %v743
        %v898 = vunpack.c.h.b16 %v743
        %v899 = vunpack.c.l.b16 %v744
        %v900 = vunpack.c.h.b16 %v744
        %v901 = vunpack.c.l.b16 %v745
        %v902 = vunpack.c.h.b16 %v745
        %v903 = vunpack.c.l.b16 %v746
        %v904 = vunpack.c.h.b16 %v746
        %v905 = vunpack.c.l.b16 %v747
        %v906 = vunpack.c.h.b16 %v747
        %v907 = vunpack.c.l.b16 %v748
        %v908 = vunpack.c.h.b16 %v748
        %v909 = vunpack.c.l.b16 %v749
        %v910 = vunpack.c.h.b16 %v749
        %v911 = vunpack.c.l.b16 %v750
        %v912 = vunpack.c.h.b16 %v750
        %v913 = vunpack.c.l.b16 %v751
        %v914 = vunpack.c.h.b16 %v751
        %v915 = vunpack.c.l.b16 %v752
        %v916 = vunpack.c.h.b16 %v752
        %v917 = vunpack.c.l.b16 %v753
        %v918 = vunpack.c.h.b16 %v753
        %v919 = vunpack.c.l.b16 %v754
        %v920 = vunpack.c.h.b16 %v754
        %v921 = vunpack.c.l.b16 %v755
        %v922 = vunpack.c.h.b16 %v755
        %v923 = vunpack.c.l.b16 %v756
        %v924 = vunpack.c.h.b16 %v756
        %v925 = vunpack.c.l.b16 %v757
        %v926 = vunpack.c.h.b16 %v757
        %v927 = vunpack.c.l.b16 %v758
        %v928 = vunpack.c.h.b16 %v758
        %v929 = vunpack.c.l.b16 %v759
        %v930 = vunpack.c.h.b16 %v759
        %v931 = vunpack.c.l.b16 %v760
        %v932 = vunpack.c.h.b16 %v760
        %v933 = vunpack.c.l.b16 %v761
        %v934 = vunpack.c.h.b16 %v761
        %v935 = vunpack.c.l.b16 %v762
        %v936 = vunpack.c.h.b16 %v762
        %v937 = vunpack.c.l.b16 %v763
        %v938 = vunpack.c.h.b16 %v763
        %v939 = vunpack.c.l.b16 %v764
        %v940 = vunpack.c.h.b16 %v764
        %v941 = vunpack.c.l.b16 %v765
        %v942 = vunpack.c.h.b16 %v765
        %v943 = vunpack.c.l.b16 %v766
        %v944 = vunpack.c.h.b16 %v766
        %v945 = vunpack.c.l.b16 %v767
        %v946 = vunpack.c.h.b16 %v767
        %v947 = vunpack.c.l.b16 %v768
        %v948 = vunpack.c.h.b16 %v768
        %v949 = vunpack.c.l.b16 %v769
        %v950 = vunpack.c.h.b16 %v769
        %v951 = vunpack.c.l.b16 %v770
        %v952 = vunpack.c.h.b16 %v770
        %v953 = vunpack.c.l.b16 %v771
        %v954 = vunpack.c.h.b16 %v771
        %v955 = vunpack.c.l.b16 %v772
        %v956 = vunpack.c.h.b16 %v772
        %v957 = vunpack.c.l.b16 %v773
        %v958 = vunpack.c.h.b16 %v773
        %v959 = vunpack.c.l.b16 %v774
        %v960 = vunpack.c.h.b16 %v774
        %v961 = vunpack.c.l.b16 %v775
        %v962 = vunpack.c.h.b16 %v775
        %v963 = vunpack.c.l.b16 %v776
        %v964 = vunpack.c.h.b16 %v776
        %v965 = vunpack.c.l.b16 %v777
        %v966 = vunpack.c.h.b16 %v777
        %v967 = vunpack.c.l.b16 %v778
        %v968 = vunpack.c.h.b16 %v778
        %v969 = vunpack.c.l.b16 %v779
        %v970 = vunpack.c.h.b16 %v779
        %v971 = vunpack.c.l.b16 %v780
        %v972 = vunpack.c.h.b16 %v780
        %v973 = vpack.c.b16 %v849, %v845
        %v974 = vpack.c.b16 %v850, %v846
        %v975 = vpack.c.b16 %v851, %v847
        %v976 = vpack.c.b16 %v852, %v848
        %v977 = vpack.c.b16 %v857, %v853
        %v978 = vpack.c.b16 %v858, %v854
        %v979 = vpack.c.b16 %v859, %v855
        %v980 = vpack.c.b16 %v860, %v856
        %v981 = vpack.c.b16 %v865, %v861
        %v982 = vpack.c.b16 %v866, %v862
        %v983 = vpack.c.b16 %v867, %v863
        %v984 = vpack.c.b16 %v868, %v864
        %v985 = vpack.c.b16 %v873, %v869
        %v986 = vpack.c.b16 %v874, %v870
        %v987 = vpack.c.b16 %v875, %v871
        %v988 = vpack.c.b16 %v876, %v872
        %v989 = vpack.c.b16 %v881, %v877
        %v990 = vpack.c.b16 %v882, %v878
        %v991 = vpack.c.b16 %v883, %v879
        %v992 = vpack.c.b16 %v884, %v880
        %v993 = vpack.c.b16 %v889, %v885
        %v994 = vpack.c.b16 %v890, %v886
        %v995 = vpack.c.b16 %v891, %v887
        %v996 = vpack.c.b16 %v892, %v888
        %v997 = vpack.c.b16 %v897, %v893
        %v998 = vpack.c.b16 %v898, %v894
        %v999 = vpack.c.b16 %v899, %v895
        %v1000 = vpack.c.b16 %v900, %v896
        %v1001 = vpack.c.b16 %v905, %v901
        %v1002 = vpack.c.b16 %v906, %v902
        %v1003 = vpack.c.b16 %v907, %v903
        %v1004 = vpack.c.b16 %v908, %v904
        %v1005 = vpack.c.b16 %v913, %v909
        %v1006 = vpack.c.b16 %v914, %v910
        %v1007 = vpack.c.b16 %v915, %v911
        %v1008 = vpack.c.b16 %v916, %v912
        %v1009 = vpack.c.b16 %v921, %v917
        %v1010 = vpack.c.b16 %v922, %v918
        %v1011 = vpack.c.b16 %v923, %v919
        %v1012 = vpack.c.b16 %v924, %v920
        %v1013 = vpack.c.b16 %v929, %v925
        %v1014 = vpack.c.b16 %v930, %v926
        %v1015 = vpack.c.b16 %v931, %v927
        %v1016 = vpack.c.b16 %v932, %v928
        %v1017 = vpack.c.b16 %v937, %v933
        %v1018 = vpack.c.b16 %v938, %v934
        %v1019 = vpack.c.b16 %v939, %v935
        %v1020 = vpack.c.b16 %v940, %v936
        %v1021 = vpack.c.b16 %v945, %v941
        %v1022 = vpack.c.b16 %v946, %v942
        %v1023 = vpack.c.b16 %v947, %v943
        %v1024 = vpack.c.b16 %v948, %v944
        %v1025 = vpack.c.b16 %v953, %v949
        %v1026 = vpack.c.b16 %v954, %v950
        %v1027 = vpack.c.b16 %v955, %v951
        %v1028 = vpack.c.b16 %v956, %v952
        %v1029 = vpack.c.b16 %v961, %v957
        %v1030 = vpack.c.b16 %v962, %v958
        %v1031 = vpack.c.b16 %v963, %v959
        %v1032 = vpack.c.b16 %v964, %v960
        %v1033 = vpack.c.b16 %v969, %v965
        %v1034 = vpack.c.b16 %v970, %v966
        %v1035 = vpack.c.b16 %v971, %v967
        %v1036 = vpack.c.b16 %v972, %v968
        %1101 = vmatpush.bf16.xpose.msra.mxu0 %v1001
        %1102 = vmatpush.bf16.xpose.msra.mxu0 %v997
        %1103 = vmatpush.bf16.xpose.msra.mxu0 %v993
        %1104 = vmatpush.bf16.xpose.msra.mxu0 %v989
        %1105 = vmatpush.bf16.xpose.msra.mxu0 %v985
        %1106 = vmatpush.bf16.xpose.msra.mxu0 %v981
        %1107 = vmatpush.bf16.xpose.msra.mxu0 %v977
        %1108 = vmatpush.bf16.xpose.msra.mxu0 %v973
        %1109 = vmatmul.bf16.gmra.mxu0 %v713
        %v1110 = vpop.f32.mrf.mxu0
        %v1111 = vadd.f32 0.0, %v1110
        %v1112 = vpop.f32.mrf.mxu0
        %1113 = vdwg.mxu0
        %1114 = vmatpush.bf16.xpose.msra.mxu0 %v1002
        %1115 = vmatpush.bf16.xpose.msra.mxu0 %v998
        %1116 = vmatpush.bf16.xpose.msra.mxu0 %v994
        %1117 = vmatpush.bf16.xpose.msra.mxu0 %v990
        %1118 = vmatpush.bf16.xpose.msra.mxu0 %v986
        %1119 = vmatpush.bf16.xpose.msra.mxu0 %v982
        %1120 = vmatpush.bf16.xpose.msra.mxu0 %v978
        %1121 = vmatpush.bf16.xpose.msra.mxu0 %v974
        %1122 = vmatmul.bf16.gmra.mxu0 %v714
        %v1123 = vpop.f32.mrf.mxu0
        %v1124 = vadd.f32 %v1111, %v1123
        %v1125 = vpop.f32.mrf.mxu0
        %1126 = vdwg.mxu0
        %1127 = vmatpush.bf16.xpose.msra.mxu0 %v1003
        %1128 = vmatpush.bf16.xpose.msra.mxu0 %v999
        %1129 = vmatpush.bf16.xpose.msra.mxu0 %v995
        %1130 = vmatpush.bf16.xpose.msra.mxu0 %v991
        %1131 = vmatpush.bf16.xpose.msra.mxu0 %v987
        %1132 = vmatpush.bf16.xpose.msra.mxu0 %v983
        %1133 = vmatpush.bf16.xpose.msra.mxu0 %v979
        %1134 = vmatpush.bf16.xpose.msra.mxu0 %v975
        %1135 = vmatmul.bf16.gmra.mxu0 %v715
        %v1136 = vpop.f32.mrf.mxu0
        %v1137 = vadd.f32 %v1124, %v1136
        %v1138 = vpop.f32.mrf.mxu0
        %1139 = vdwg.mxu0
        %1140 = vmatpush.bf16.xpose.msra.mxu0 %v1004
        %1141 = vmatpush.bf16.xpose.msra.mxu0 %v1000
        %1142 = vmatpush.bf16.xpose.msra.mxu0 %v996
        %1143 = vmatpush.bf16.xpose.msra.mxu0 %v992
        %1144 = vmatpush.bf16.xpose.msra.mxu0 %v988
        %1145 = vmatpush.bf16.xpose.msra.mxu0 %v984
        %1146 = vmatpush.bf16.xpose.msra.mxu0 %v980
        %1147 = vmatpush.bf16.xpose.msra.mxu0 %v976
        %1148 = vmatmul.bf16.gmra.mxu0 %v716
        %v1149 = vpop.f32.mrf.mxu0
        %v1150 = vadd.f32 %v1137, %v1149
        %v1151 = vpop.f32.mrf.mxu0
        %1152 = vdwg.mxu0
        %1153 = vmatpush.bf16.xpose.msra.mxu0 %v1033
        %1154 = vmatpush.bf16.xpose.msra.mxu0 %v1029
        %1155 = vmatpush.bf16.xpose.msra.mxu0 %v1025
        %1156 = vmatpush.bf16.xpose.msra.mxu0 %v1021
        %1157 = vmatpush.bf16.xpose.msra.mxu0 %v1017
        %1158 = vmatpush.bf16.xpose.msra.mxu0 %v1013
        %1159 = vmatpush.bf16.xpose.msra.mxu0 %v1009
        %1160 = vmatpush.bf16.xpose.msra.mxu0 %v1005
        %1161 = vmatmul.bf16.gmra.mxu0 %v713
        %v1162 = vpop.f32.mrf.mxu0
        %v1163 = vadd.f32 0.0, %v1162
        %v1164 = vpop.f32.mrf.mxu0
        %1165 = vdwg.mxu0
        %1166 = vmatpush.bf16.xpose.msra.mxu0 %v1034
        %1167 = vmatpush.bf16.xpose.msra.mxu0 %v1030
        %1168 = vmatpush.bf16.xpose.msra.mxu0 %v1026
        %1169 = vmatpush.bf16.xpose.msra.mxu0 %v1022
        %1170 = vmatpush.bf16.xpose.msra.mxu0 %v1018
        %1171 = vmatpush.bf16.xpose.msra.mxu0 %v1014
        %1172 = vmatpush.bf16.xpose.msra.mxu0 %v1010
        %1173 = vmatpush.bf16.xpose.msra.mxu0 %v1006
        %1174 = vmatmul.bf16.gmra.mxu0 %v714
        %v1175 = vpop.f32.mrf.mxu0
        %v1176 = vadd.f32 %v1163, %v1175
        %v1177 = vpop.f32.mrf.mxu0
        %1178 = vdwg.mxu0
        %1179 = vmatpush.bf16.xpose.msra.mxu0 %v1035
        %1180 = vmatpush.bf16.xpose.msra.mxu0 %v1031
        %1181 = vmatpush.bf16.xpose.msra.mxu0 %v1027
        %1182 = vmatpush.bf16.xpose.msra.mxu0 %v1023
        %1183 = vmatpush.bf16.xpose.msra.mxu0 %v1019
        %1184 = vmatpush.bf16.xpose.msra.mxu0 %v1015
        %1185 = vmatpush.bf16.xpose.msra.mxu0 %v1011
        %1186 = vmatpush.bf16.xpose.msra.mxu0 %v1007
        %1187 = vmatmul.bf16.gmra.mxu0 %v715
        %v1188 = vpop.f32.mrf.mxu0
        %v1189 = vadd.f32 %v1176, %v1188
        %v1190 = vpop.f32.mrf.mxu0
        %1191 = vdwg.mxu0
        %1192 = vmatpush.bf16.xpose.msra.mxu0 %v1036
        %1193 = vmatpush.bf16.xpose.msra.mxu0 %v1032
        %1194 = vmatpush.bf16.xpose.msra.mxu0 %v1028
        %1195 = vmatpush.bf16.xpose.msra.mxu0 %v1024
        %1196 = vmatpush.bf16.xpose.msra.mxu0 %v1020
        %1197 = vmatpush.bf16.xpose.msra.mxu0 %v1016
        %1198 = vmatpush.bf16.xpose.msra.mxu0 %v1012
        %1199 = vmatpush.bf16.xpose.msra.mxu0 %v1008
        %1200 = vmatmul.bf16.gmra.mxu0 %v716
        %v1201 = vpop.f32.mrf.mxu0
        %v1202 = vadd.f32 %v1189, %v1201
        %v1203 = vpop.f32.mrf.mxu0
        %1204 = vdwg.mxu0
        %v1205 = vpack.c.bf16 %v1202, %v1150
        %1206 = vst [vmem:[%s211] sm:$0xff] %v1205
        %s1207 = smul.u32 2, %s18
        %p1208 = scmp.lt.s32.totalorder %s1207, 9
        %s1209 = scalar_select %p1208, %s1207, 9
        %s1210 = smul.addr %s1209, 4
        %s1211 = scalar_lea.vmem %s3, %s1210
        // Predicated region
        $region41: #{mlp_forward.1} parent=31 // pred_check
          %p1212 = pneg %p104
        $region42: #{mlp_forward.1} parent=31 // pred_check_branch
          %1214 = sbr.rel (%p1212) target = $region44
        $region43: #{mlp_forward.1} parent=31 // pred_region
          %s1215 = smul.u32 2, %s18
        $region44: #{mlp_forward.1} parent=31 // pred_fallthru
          _
      $region32: #{mlp_forward.1} parent=5 // pred_fallthru
        _
      %p1216 = scmp.le.s32.totalorder 2, %s13
      // Predicated region
      $region45: #{mlp_forward.1} parent=5 // pred_check
        %p1217 = pneg %p1216
      $region46: #{mlp_forward.1} parent=5 // pred_check_branch
        %1219 = sbr.rel (%p1217) target = $region48
      $region47: #{mlp_forward.1} parent=5 // pred_region
        %s1220 = ssub.s32 %s13, 2
        // Predicated region
        $region49: #{mlp_forward.1} parent=47 // pred_check
          %p1221 = pneg %p110
        $region50: #{mlp_forward.1} parent=47 // pred_check_branch
          %1223 = sbr.rel (%p1221) target = $region52
        $region51: #{mlp_forward.1} parent=47 // pred_region
          %s1224 = smul.u32 2, %s19
          %p1225 = scmp.lt.s32.totalorder %s1224, 9
          %s1226 = scalar_select %p1225, %s1224, 9
          %s1227 = smul.addr %s1226, 4
          %s1228 = scalar_lea.vmem %s3, %s1227
        $region52: #{mlp_forward.1} parent=47 // pred_fallthru
          _
      $region48: #{mlp_forward.1} parent=5 // pred_fallthru
        _
    $region6: #{mlp_forward.1} parent=1 // loop_footer
      %s17 = sadd.s32 1, %s13
    $region7: #{mlp_forward.1} parent=1 // loop_footer_branch
      %12 = sbr.rel target = $region3
    $region8: #{mlp_forward.1} parent=1 // loop_exit
      _
    %1229 = vsyncpa [#allocation3], 1
    %s1230 = scalar_lea.sflag [#allocation3], 1
    %1231 = vsyncpa %s1230, 1
    %1232 = vsyncpa [#allocation5], 1
    %s1233 = scalar_lea.sflag [#allocation5], 1
    %1234 = vsyncpa %s1233, 1

</llo_original>
